<compile_context>
chip_gen: v6e
topology: v6e:2x2x1
jax: 0.10.0
libtpu: 0.0.40
codegen_flags: <defaults>
</compile_context>

<pallas_src>
import jax
import jax.numpy as jnp
from jax import lax
from jax.experimental import pallas as pl
from jax.experimental.pallas import tpu as pltpu


def _round_up(x, m):
    return (x + m - 1) // m * m


def _choose_tiles(n, d_pad):
    """Returns (n_pad, tm, tn) with n_pad % tm == 0 and n_pad % tn == 0."""
    if n <= 128:
        n_pad = _round_up(max(n, 8), 8)
        return n_pad, n_pad, n_pad            # single block on both axes
    if n <= 512:
        n_pad = _round_up(n, 128)
        return n_pad, 128, n_pad              # row-tiled, single column block
    # Large batches: flash-style tiling on both axes.  tm=256 fills the
    # 256-wide MXU M dimension on v6e/v7x; tn=512 keeps a lane-dense slab.
    tm, tn = 256, 512
    n_pad = _round_up(n, 512)
    # Shrink tiles if the feature dim is huge so the double-buffered streamed
    # x tiles stay well under the scoped-VMEM defaults on every generation.
    # TODO(synk): for extremely large feat_dim also tile the d axis (third,
    # reduction grid axis) instead of only shrinking tm/tn.
    while 2 * 4 * (tm + tn) * d_pad > (20 << 20) and tn > 128:
        tn //= 2
    while 2 * 4 * (tm + tn) * d_pad > (20 << 20) and tm > 128:
        tm //= 2
    return n_pad, tm, tn


def _bdtr_kernel(x_row_ref, x_col_ref, sqh_col_ref, sqh_row_ref,
                 t_col_ref, t_row_ref, ap_ref, an_ref):
    """One (tm, tn) tile of the pairwise half-squared-distance matrix.

    ap_ref / an_ref double as running max / min accumulators across the
    column-block (j) axis; the clamp+sqrt finalize happens on the last j.
    """
    j = pl.program_id(1)

    @pl.when(j == 0)
    def _init():
        ap_ref[...] = jnp.full(ap_ref.shape, -jnp.inf, dtype=ap_ref.dtype)
        an_ref[...] = jnp.full(an_ref.shape, jnp.inf, dtype=an_ref.dtype)

    # xb @ xc.T without an explicit transpose (contract the last dims).
    # Full-f32 MXU precision: the norm-expansion is cancellation sensitive.
    gram = lax.dot_general(
        x_row_ref[...], x_col_ref[...],
        dimension_numbers=(((1,), (1,)), ((), ())),
        preferred_element_type=jnp.float32,
        precision=lax.Precision.HIGHEST)                       # (tm, tn)

    # Half squared distances: 0.5||xi||^2 + 0.5||xj||^2 - xi.xj .
    # Padded columns carry +1e30 in sqh_row, so they never win the min below.
    half_d2 = sqh_col_ref[...] + sqh_row_ref[...] - gram       # (tm, tn)

    same = t_col_ref[...] == t_row_ref[...]                    # (tm, tn) bool

    blk_ap = jnp.max(jnp.where(same, half_d2, -jnp.inf), axis=1, keepdims=True)
    blk_an = jnp.min(jnp.where(same, jnp.inf, half_d2), axis=1, keepdims=True)

    ap_ref[...] = jnp.maximum(ap_ref[...], blk_ap)
    an_ref[...] = jnp.minimum(an_ref[...], blk_an)

    @pl.when(j == pl.num_programs(1) - 1)
    def _finalize():
        # clamp + sqrt only on the two (tm, 1) reduced vectors (monotonic, so
        # doing the arg-reductions on half squared distances is exact).
        ap_ref[...] = jnp.sqrt(jnp.maximum(2.0 * ap_ref[...], jnp.float32(1e-12)))
        an_ref[...] = jnp.sqrt(jnp.maximum(2.0 * an_ref[...], jnp.float32(1e-12)))


def bdtr_loss(inputs, targets, margin=0.5):
    """inputs: (n, d) float features; targets: (n,) integer labels."""
    n, d = inputs.shape

    d_pad = max(128, _round_up(d, 128))
    n_pad, tm, tn = _choose_tiles(n, d_pad)

    x = inputs.astype(jnp.float32)
    x = jnp.pad(x, ((0, n_pad - n), (0, d_pad - d)))

    # Sentinel label strictly below every real label -> padded columns never
    # enter a real row's positive set (robust against any user label value).
    t = targets.astype(jnp.int32)
    sentinel = jnp.min(t) - jnp.int32(1)
    t = jnp.concatenate([t, jnp.full((n_pad - n,), sentinel, dtype=jnp.int32)])

    sq = jnp.sum(x * x, axis=1)                                # (n_pad,)
    sqh_col = (0.5 * sq).reshape(n_pad, 1)                     # (n_pad, 1)
    # Fold the padded-column mask into the row norm term: +1e30 on padding.
    pad_penalty = jnp.where(jnp.arange(n_pad) < n, 0.0, 1e30).astype(jnp.float32)
    sqh_row = (0.5 * sq + pad_penalty).reshape(1, n_pad)       # (1, n_pad)

    t_col = t.reshape(n_pad, 1)
    t_row = t.reshape(1, n_pad)

    n_row_blocks = n_pad // tm
    n_col_blocks = n_pad // tn
    grid = (n_row_blocks, n_col_blocks)

    cost = pl.CostEstimate(
        flops=2 * n_pad * n_pad * d_pad + 10 * n_pad * n_pad,
        transcendentals=2 * n_pad,
        bytes_accessed=4 * (n_pad * d_pad                        # row stream (once)
                            + n_row_blocks * n_pad * d_pad       # col stream per row block
                            + n_row_blocks * 3 * n_pad           # norms/labels re-reads
                            + 4 * n_pad),                        # col vectors + outputs
    )

    # VMEM budget: double-buffered x tiles + headroom for the (tm, tn) slab
    # temporaries; clamped to stay within v7x's 64 MiB physical VMEM.
    tile_bytes = 4 * (tm + tn) * d_pad
    vmem_limit = 2 * tile_bytes + 8 * 4 * tm * tn + (4 << 20)
    vmem_limit = int(max(16 << 20, min(vmem_limit, 60 << 20)))

    grid_spec = pltpu.PrefetchScalarGridSpec(
        num_scalar_prefetch=0,
        grid=grid,
        in_specs=[
            pl.BlockSpec((tm, d_pad), lambda i, j: (i, 0)),   # x row block
            pl.BlockSpec((tn, d_pad), lambda i, j: (j, 0)),   # x column block
            pl.BlockSpec((tm, 1), lambda i, j: (i, 0)),       # 0.5*||x||^2 (col vec)
            pl.BlockSpec((1, tn), lambda i, j: (0, j)),       # 0.5*||x||^2 (+1e30 pad)
            pl.BlockSpec((tm, 1), lambda i, j: (i, 0)),       # labels (col vec)
            pl.BlockSpec((1, tn), lambda i, j: (0, j)),       # labels (row vec)
        ],
        out_specs=(
            pl.BlockSpec((tm, 1), lambda i, j: (i, 0)),       # dist_ap
            pl.BlockSpec((tm, 1), lambda i, j: (i, 0)),       # dist_an
        ),
    )

    dist_ap, dist_an = pl.pallas_call(
        _bdtr_kernel,
        out_shape=(
            jax.ShapeDtypeStruct((n_pad, 1), jnp.float32),
            jax.ShapeDtypeStruct((n_pad, 1), jnp.float32),
        ),
        grid_spec=grid_spec,
        compiler_params=pltpu.CompilerParams(
            dimension_semantics=("parallel", "arbitrary"),
            vmem_limit_bytes=vmem_limit),
        cost_estimate=cost,
    )(x, x, sqh_col, sqh_row, t_col, t_row)

    # Tiny O(n) finish on the real rows only (padded rows sliced off).
    ap = dist_ap[:n, 0]
    an = dist_an[:n, 0]
    loss = jnp.mean(jnp.maximum(ap - an + jnp.float32(margin), 0.0))
    correct = jnp.sum((an >= ap).astype(jnp.int32))
    return loss, correct


def _reference(feats, labels, margin):
    """Pure-JAX reference mirroring the PyTorch module (full-f32 Gram)."""
    sq = jnp.sum(feats ** 2, axis=1, keepdims=True)
    gram = jnp.dot(feats, feats.T, precision=lax.Precision.HIGHEST)
    dist = jnp.sqrt(jnp.maximum(sq + sq.T - 2.0 * gram, 1e-12))
    mask = labels[:, None] == labels[None, :]
    ap = jnp.max(jnp.where(mask, dist, -jnp.inf), axis=1)
    an = jnp.min(jnp.where(mask, jnp.inf, dist), axis=1)
    loss = jnp.mean(jnp.maximum(ap - an + margin, 0.0))
    correct = jnp.sum((an >= ap).astype(jnp.int32))
    return loss, correct


if __name__ == "__main__":
    key = jax.random.PRNGKey(0)
    k1, k2 = jax.random.split(key)

    # --- small case: (batch_size=8, feat_dim=32), labels with repeats so
    #     every row has at least one positive and one negative ---
    feats = jax.random.normal(k1, (8, 32), dtype=jnp.float32)
    labels = jnp.array([0, 0, 1, 1, 2, 2, 3, 3], dtype=jnp.int32)

    loss, correct = bdtr_loss(feats, labels, margin=0.5)
    loss = jax.block_until_ready(loss)
    correct = jax.block_until_ready(correct)
    ref_loss, ref_correct = _reference(feats, labels, 0.5)
    assert jnp.allclose(loss, ref_loss, rtol=1e-4, atol=1e-4), (loss, ref_loss)
    assert int(correct) == int(ref_correct), (int(correct), int(ref_correct))

    # --- larger case exercising the tiled path (multiple row blocks, multiple
    #     column blocks, padded rows and columns) ---
    feats2 = jax.random.normal(k2, (600, 96), dtype=jnp.float32)
    labels2 = jnp.arange(600, dtype=jnp.int32) % 20
    loss2, correct2 = bdtr_loss(feats2, labels2, margin=0.3)
    loss2 = jax.block_until_ready(loss2)
    ref_loss2, ref_correct2 = _reference(feats2, labels2, 0.3)
    assert jnp.allclose(loss2, ref_loss2, rtol=1e-4, atol=1e-4), (loss2, ref_loss2)
    assert int(correct2) == int(ref_correct2), (int(correct2), int(ref_correct2))

    print("KERNEL_OK")
</pallas_src>

<mosaic_0001>
module attributes {stable_mosaic.version = 11 : i64} {
  func.func @_bdtr_kernel(%arg0: i32, %arg1: i32, %arg2: memref<8x128xf32, #tpu.memory_space<vmem>>, %arg3: memref<8x128xf32, #tpu.memory_space<vmem>>, %arg4: memref<8x1xf32, #tpu.memory_space<vmem>>, %arg5: memref<1x8xf32, #tpu.memory_space<vmem>>, %arg6: memref<8x1xi32, #tpu.memory_space<vmem>>, %arg7: memref<1x8xi32, #tpu.memory_space<vmem>>, %arg8: memref<8x1xf32, #tpu.memory_space<vmem>>, %arg9: memref<8x1xf32, #tpu.memory_space<vmem>>) attributes {dimension_semantics = [#tpu.dimension_semantics<parallel>, #tpu.dimension_semantics<arbitrary>], iteration_bounds = array<i64: 1, 1>, scalar_prefetch = 0 : i64, scratch_operands = 0 : i64, tpu.core_type = #tpu.core_type<tc>, window_params = [{transform_indices = @transform_0, window_bounds = array<i64: 8, 128>}, {transform_indices = @transform_1, window_bounds = array<i64: 8, 128>}, {transform_indices = @transform_2, window_bounds = array<i64: 8, 1>}, {transform_indices = @transform_3, window_bounds = array<i64: 1, 8>}, {transform_indices = @transform_4, window_bounds = array<i64: 8, 1>}, {transform_indices = @transform_5, window_bounds = array<i64: 1, 8>}, {transform_indices = @transform_6, window_bounds = array<i64: 8, 1>}, {transform_indices = @transform_7, window_bounds = array<i64: 8, 1>}]} {
    %c0_i32 = arith.constant 0 : i32
    %0 = arith.cmpi eq, %arg1, %c0_i32 : i32
    %1 = arith.extui %0 : i1 to i32
    %c0_i32_0 = arith.constant 0 : i32
    %2 = arith.cmpi ne, %1, %c0_i32_0 : i32
    scf.if %2 {
      %cst_26 = arith.constant 0xFF800000 : f32
      %34 = vector.broadcast %cst_26 : f32 to vector<8x1xf32>
      %c0_27 = arith.constant 0 : index
      %c0_28 = arith.constant 0 : index
      %35 = vector.load %arg8[%c0_27, %c0_28] : memref<8x1xf32, #tpu.memory_space<vmem>>, vector<8x1xf32>
      tpu.vector_store %arg8[%c0_27, %c0_28], %34 {strides = array<i32>} : memref<8x1xf32, #tpu.memory_space<vmem>>, vector<8x1xf32>,
      %cst_29 = arith.constant 0x7F800000 : f32
      %36 = vector.broadcast %cst_29 : f32 to vector<8x1xf32>
      %c0_30 = arith.constant 0 : index
      %c0_31 = arith.constant 0 : index
      %37 = vector.load %arg9[%c0_30, %c0_31] : memref<8x1xf32, #tpu.memory_space<vmem>>, vector<8x1xf32>
      tpu.vector_store %arg9[%c0_30, %c0_31], %36 {strides = array<i32>} : memref<8x1xf32, #tpu.memory_space<vmem>>, vector<8x1xf32>,
    } else {
    }
    %c0 = arith.constant 0 : index
    %c0_1 = arith.constant 0 : index
    %3 = vector.load %arg2[%c0, %c0_1] : memref<8x128xf32, #tpu.memory_space<vmem>>, vector<8x128xf32>
    %c0_2 = arith.constant 0 : index
    %c0_3 = arith.constant 0 : index
    %4 = vector.load %arg3[%c0_2, %c0_3] : memref<8x128xf32, #tpu.memory_space<vmem>>, vector<8x128xf32>
    %cst = arith.constant dense<0.000000e+00> : vector<8x8xf32>
    %5 = tpu.matmul %3, %4, %cst {dimension_numbers = #tpu.dot_dimension_numbers<[1], [1], [0], [0], [0, 0, 1, 0], [], []>, precision = #tpu.contract_precision<fp32>} : vector<8x128xf32>, vector<8x128xf32>, vector<8x8xf32> -> vector<8x8xf32>
    %c0_4 = arith.constant 0 : index
    %c0_5 = arith.constant 0 : index
    %6 = vector.load %arg4[%c0_4, %c0_5] : memref<8x1xf32, #tpu.memory_space<vmem>>, vector<8x1xf32>
    %c0_6 = arith.constant 0 : index
    %c0_7 = arith.constant 0 : index
    %7 = vector.load %arg5[%c0_6, %c0_7] : memref<1x8xf32, #tpu.memory_space<vmem>>, vector<1x8xf32>
    %8 = vector.broadcast %6 : vector<8x1xf32> to vector<8x8xf32>
    %9 = vector.broadcast %7 : vector<1x8xf32> to vector<8x8xf32>
    %10 = arith.addf %8, %9 : vector<8x8xf32>
    %11 = arith.subf %10, %5 : vector<8x8xf32>
    %c0_8 = arith.constant 0 : index
    %c0_9 = arith.constant 0 : index
    %12 = vector.load %arg6[%c0_8, %c0_9] : memref<8x1xi32, #tpu.memory_space<vmem>>, vector<8x1xi32>
    %c0_10 = arith.constant 0 : index
    %c0_11 = arith.constant 0 : index
    %13 = vector.load %arg7[%c0_10, %c0_11] : memref<1x8xi32, #tpu.memory_space<vmem>>, vector<1x8xi32>
    %14 = vector.broadcast %12 : vector<8x1xi32> to vector<8x8xi32>
    %15 = vector.broadcast %13 : vector<1x8xi32> to vector<8x8xi32>
    %16 = arith.cmpi eq, %14, %15 : vector<8x8xi32>
    %cst_12 = arith.constant 0xFF800000 : f32
    %17 = vector.broadcast %cst_12 : f32 to vector<8x8xf32>
    %18 = arith.select %16, %11, %17 : vector<8x8xi1>, vector<8x8xf32>
    %cst_13 = arith.constant dense<0xFF800000> : vector<8xf32>
    %19 = vector.multi_reduction <maximumf>, %18, %cst_13 [1] : vector<8x8xf32> to vector<8xf32>
    %20 = vector.shape_cast %19 : vector<8xf32> to vector<8x1xf32>
    %cst_14 = arith.constant 0x7F800000 : f32
    %21 = vector.broadcast %cst_14 : f32 to vector<8x8xf32>
    %22 = arith.select %16, %21, %11 : vector<8x8xi1>, vector<8x8xf32>
    %cst_15 = arith.constant dense<0x7F800000> : vector<8xf32>
    %23 = vector.multi_reduction <minimumf>, %22, %cst_15 [1] : vector<8x8xf32> to vector<8xf32>
    %24 = vector.shape_cast %23 : vector<8xf32> to vector<8x1xf32>
    %c0_16 = arith.constant 0 : index
    %c0_17 = arith.constant 0 : index
    %25 = vector.load %arg8[%c0_16, %c0_17] : memref<8x1xf32, #tpu.memory_space<vmem>>, vector<8x1xf32>
    %26 = arith.maximumf %25, %20 : vector<8x1xf32>
    %c0_18 = arith.constant 0 : index
    %c0_19 = arith.constant 0 : index
    %27 = vector.load %arg8[%c0_18, %c0_19] : memref<8x1xf32, #tpu.memory_space<vmem>>, vector<8x1xf32>
    tpu.vector_store %arg8[%c0_18, %c0_19], %26 {strides = array<i32>} : memref<8x1xf32, #tpu.memory_space<vmem>>, vector<8x1xf32>,
    %c0_20 = arith.constant 0 : index
    %c0_21 = arith.constant 0 : index
    %28 = vector.load %arg9[%c0_20, %c0_21] : memref<8x1xf32, #tpu.memory_space<vmem>>, vector<8x1xf32>
    %29 = arith.minimumf %28, %24 : vector<8x1xf32>
    %c0_22 = arith.constant 0 : index
    %c0_23 = arith.constant 0 : index
    %30 = vector.load %arg9[%c0_22, %c0_23] : memref<8x1xf32, #tpu.memory_space<vmem>>, vector<8x1xf32>
    tpu.vector_store %arg9[%c0_22, %c0_23], %29 {strides = array<i32>} : memref<8x1xf32, #tpu.memory_space<vmem>>, vector<8x1xf32>,
    %c0_i32_24 = arith.constant 0 : i32
    %31 = arith.cmpi eq, %arg1, %c0_i32_24 : i32
    %32 = arith.extui %31 : i1 to i32
    %c0_i32_25 = arith.constant 0 : i32
    %33 = arith.cmpi ne, %32, %c0_i32_25 : i32
    scf.if %33 {
      %c0_26 = arith.constant 0 : index
      %c0_27 = arith.constant 0 : index
      %34 = vector.load %arg8[%c0_26, %c0_27] : memref<8x1xf32, #tpu.memory_space<vmem>>, vector<8x1xf32>
      %cst_28 = arith.constant 2.000000e+00 : f32
      %35 = vector.broadcast %cst_28 : f32 to vector<8x1xf32>
      %36 = arith.mulf %35, %34 : vector<8x1xf32>
      %cst_29 = arith.constant 9.99999996E-13 : f32
      %37 = vector.broadcast %cst_29 : f32 to vector<8x1xf32>
      %38 = arith.maximumf %36, %37 : vector<8x1xf32>
      %39 = math.sqrt %38 : vector<8x1xf32>
      %c0_30 = arith.constant 0 : index
      %c0_31 = arith.constant 0 : index
      %40 = vector.load %arg8[%c0_30, %c0_31] : memref<8x1xf32, #tpu.memory_space<vmem>>, vector<8x1xf32>
      tpu.vector_store %arg8[%c0_30, %c0_31], %39 {strides = array<i32>} : memref<8x1xf32, #tpu.memory_space<vmem>>, vector<8x1xf32>,
      %c0_32 = arith.constant 0 : index
      %c0_33 = arith.constant 0 : index
      %41 = vector.load %arg9[%c0_32, %c0_33] : memref<8x1xf32, #tpu.memory_space<vmem>>, vector<8x1xf32>
      %cst_34 = arith.constant 2.000000e+00 : f32
      %42 = vector.broadcast %cst_34 : f32 to vector<8x1xf32>
      %43 = arith.mulf %42, %41 : vector<8x1xf32>
      %cst_35 = arith.constant 9.99999996E-13 : f32
      %44 = vector.broadcast %cst_35 : f32 to vector<8x1xf32>
      %45 = arith.maximumf %43, %44 : vector<8x1xf32>
      %46 = math.sqrt %45 : vector<8x1xf32>
      %c0_36 = arith.constant 0 : index
      %c0_37 = arith.constant 0 : index
      %47 = vector.load %arg9[%c0_36, %c0_37] : memref<8x1xf32, #tpu.memory_space<vmem>>, vector<8x1xf32>
      tpu.vector_store %arg9[%c0_36, %c0_37], %46 {strides = array<i32>} : memref<8x1xf32, #tpu.memory_space<vmem>>, vector<8x1xf32>,
    } else {
    }
    return
  }
  func.func @transform_0(%arg0: i32, %arg1: i32) -> (i32, i32) {
    %c0_i32 = arith.constant 0 : i32
    %c0_i32_0 = arith.constant 0 : i32
    return %arg0, %c0_i32 : i32, i32
  }
  func.func @transform_1(%arg0: i32, %arg1: i32) -> (i32, i32) {
    %c0_i32 = arith.constant 0 : i32
    %c0_i32_0 = arith.constant 0 : i32
    return %arg1, %c0_i32 : i32, i32
  }
  func.func @transform_2(%arg0: i32, %arg1: i32) -> (i32, i32) {
    %c0_i32 = arith.constant 0 : i32
    %c0_i32_0 = arith.constant 0 : i32
    return %arg0, %c0_i32 : i32, i32
  }
  func.func @transform_3(%arg0: i32, %arg1: i32) -> (i32, i32) {
    %c0_i32 = arith.constant 0 : i32
    %c0_i32_0 = arith.constant 0 : i32
    return %c0_i32, %arg1 : i32, i32
  }
  func.func @transform_4(%arg0: i32, %arg1: i32) -> (i32, i32) {
    %c0_i32 = arith.constant 0 : i32
    %c0_i32_0 = arith.constant 0 : i32
    return %arg0, %c0_i32 : i32, i32
  }
  func.func @transform_5(%arg0: i32, %arg1: i32) -> (i32, i32) {
    %c0_i32 = arith.constant 0 : i32
    %c0_i32_0 = arith.constant 0 : i32
    return %c0_i32, %arg1 : i32, i32
  }
  func.func @transform_6(%arg0: i32, %arg1: i32) -> (i32, i32) {
    %c0_i32 = arith.constant 0 : i32
    %c0_i32_0 = arith.constant 0 : i32
    return %arg0, %c0_i32 : i32, i32
  }
  func.func @transform_7(%arg0: i32, %arg1: i32) -> (i32, i32) {
    %c0_i32 = arith.constant 0 : i32
    %c0_i32_0 = arith.constant 0 : i32
    return %arg0, %c0_i32 : i32, i32
  }
}

</mosaic_0001>

<llo_original>
// kernel: tpu_custom_call.1
$region0: #{tpu_custom_call.1}
  #allocation0 [shape = 'u32[]', space=smem, size = 0x4, offset = 0x4, fixed_abs, tag = 'smem constant byte address 0x4 - core index']
  #allocation1 [shape = 'u32[144,128]{1,0:T(1,128)}', space=vmem, size = 0x12000, scoped, tag = 'internal scratch']
  %s0 = inlined_call_operand.vmem [shape: f32[8,128], index: 0, kind: input, shape index: {}]
  %s1 = inlined_call_operand.vmem [shape: f32[8,128], index: 1, kind: input, shape index: {}]
  %s2 = inlined_call_operand.vmem [shape: f32[8,1], index: 2, kind: input, shape index: {}]
  %s3 = inlined_call_operand.vmem [shape: f32[1,8], index: 3, kind: input, shape index: {}]
  %s4 = inlined_call_operand.vmem [shape: s32[8,1], index: 4, kind: input, shape index: {}]
  %s5 = inlined_call_operand.vmem [shape: s32[1,8], index: 5, kind: input, shape index: {}]
  %s6 = inlined_call_operand.vmem [shape: f32[8,1], index: 6, kind: output, shape index: {0}]
  %s7 = inlined_call_operand.vmem [shape: f32[8,1], index: 7, kind: output, shape index: {1}]
  %8 = xla_tuple %s6, %s7
  %s9 = sld [smem:[#allocation0]]
  $region50: #{tpu_custom_call.1} parent=0
    _
  %s11 = ssub.s32 1, %s9
  %s12 = scalar_select 0, %s11, %s9
  // Predicated region
  $region2: #{tpu_custom_call.1} parent=0 // pred_check
    _
  $region3: #{tpu_custom_call.1} parent=0 // pred_check_branch
    %14 = sbr.rel (0) target = $region5
  $region4: #{tpu_custom_call.1} parent=0 // pred_region
    _
  $region5: #{tpu_custom_call.1} parent=0 // pred_fallthru
    _
  // Predicated region
  $region6: #{tpu_custom_call.1} parent=0 // pred_check
    _
  $region7: #{tpu_custom_call.1} parent=0 // pred_check_branch
    %16 = sbr.rel (0) target = $region9
  $region8: #{tpu_custom_call.1} parent=0 // pred_region
    _
  $region9: #{tpu_custom_call.1} parent=0 // pred_fallthru
    _
  // Predicated region
  $region10: #{tpu_custom_call.1} parent=0 // pred_check
    _
  $region11: #{tpu_custom_call.1} parent=0 // pred_check_branch
    %18 = sbr.rel (0) target = $region13
  $region12: #{tpu_custom_call.1} parent=0 // pred_region
    _
  $region13: #{tpu_custom_call.1} parent=0 // pred_fallthru
    _
  // Predicated region
  $region14: #{tpu_custom_call.1} parent=0 // pred_check
    _
  $region15: #{tpu_custom_call.1} parent=0 // pred_check_branch
    %20 = sbr.rel (0) target = $region17
  $region16: #{tpu_custom_call.1} parent=0 // pred_region
    _
  $region17: #{tpu_custom_call.1} parent=0 // pred_fallthru
    _
  // Predicated region
  $region18: #{tpu_custom_call.1} parent=0 // pred_check
    _
  $region19: #{tpu_custom_call.1} parent=0 // pred_check_branch
    %22 = sbr.rel (0) target = $region21
  $region20: #{tpu_custom_call.1} parent=0 // pred_region
    _
  $region21: #{tpu_custom_call.1} parent=0 // pred_fallthru
    _
  // Predicated region
  $region22: #{tpu_custom_call.1} parent=0 // pred_check
    _
  $region23: #{tpu_custom_call.1} parent=0 // pred_check_branch
    %24 = sbr.rel (0) target = $region25
  $region24: #{tpu_custom_call.1} parent=0 // pred_region
    _
  $region25: #{tpu_custom_call.1} parent=0 // pred_fallthru
    _
  %p25 = scmp.eq.s32.totalorder 0, 0
  // Predicated region
  $region26: #{tpu_custom_call.1} parent=0 // pred_check
    %p26 = pneg %p25
  $region27: #{tpu_custom_call.1} parent=0 // pred_check_branch
    %28 = sbr.rel (%p26) target = $region29
  $region28: #{tpu_custom_call.1} parent=0 // pred_region
    %vm29 = vcmask 7168
    %30 = vst.msk [vmem:[%s6] sm:$0xff] %vm29, -inf
    %31 = vst.msk [vmem:[%s7] sm:$0xff] %vm29, inf
  $region29: #{tpu_custom_call.1} parent=0 // pred_fallthru
    _
  %v32 = vld [vmem:[%s0] sm:$0xff]
  %v33 = vld [vmem:[%s1] sm:$0xff]
  %34 = vmatprep.subr.mxu0 0.0
  %35 = vmatpush1.xpose.msra.mxu0 0.0
  %36 = vmatprep.subr.mxu0 0.0
  %37 = vmatpush1.xpose.msra.mxu0 0.0
  %38 = vmatprep.subr.mxu0 0.0
  %39 = vmatpush1.xpose.msra.mxu0 0.0
  %40 = vmatprep.subr.mxu0 0.0
  %41 = vmatpush1.xpose.msra.mxu0 0.0
  %42 = vmatprep.subr.mxu0 0.0
  %43 = vmatpush1.xpose.msra.mxu0 0.0
  %44 = vmatprep.subr.mxu0 0.0
  %45 = vmatpush1.xpose.msra.mxu0 0.0
  %46 = vmatprep.subr.mxu0 0.0
  %47 = vmatpush1.xpose.msra.mxu0 0.0
  %48 = vmatprep.subr.mxu0 0.0
  %49 = vmatpush1.xpose.msra.mxu0 0.0
  %50 = vmatprep.subr.mxu0 0.0
  %51 = vmatpush1.xpose.msra.mxu0 0.0
  %52 = vmatprep.subr.mxu0 0.0
  %53 = vmatpush1.xpose.msra.mxu0 0.0
  %54 = vmatprep.subr.mxu0 0.0
  %55 = vmatpush1.xpose.msra.mxu0 0.0
  %56 = vmatprep.subr.mxu0 0.0
  %57 = vmatpush1.xpose.msra.mxu0 0.0
  %58 = vmatprep.subr.mxu0 0.0
  %59 = vmatpush1.xpose.msra.mxu0 0.0
  %60 = vmatprep.subr.mxu0 0.0
  %61 = vmatpush1.xpose.msra.mxu0 0.0
  %62 = vmatprep.subr.mxu0 0.0
  %63 = vmatpush1.xpose.msra.mxu0 0.0
  %64 = vmatprep.subr.mxu0 0.0
  %v65 = vand.u32 %v33, 4294901760
  %66 = vmatpush1.xpose.msra.mxu0 %v65
  %67 = vmatprep.subr.mxu0 0.0
  %68 = vmatpush2.xpose.msra.mxu0 0.0
  %69 = vmatprep.subr.mxu0 0.0
  %70 = vmatpush2.xpose.msra.mxu0 0.0
  %71 = vmatprep.subr.mxu0 0.0
  %72 = vmatpush2.xpose.msra.mxu0 0.0
  %73 = vmatprep.subr.mxu0 0.0
  %74 = vmatpush2.xpose.msra.mxu0 0.0
  %75 = vmatprep.subr.mxu0 0.0
  %76 = vmatpush2.xpose.msra.mxu0 0.0
  %77 = vmatprep.subr.mxu0 0.0
  %78 = vmatpush2.xpose.msra.mxu0 0.0
  %79 = vmatprep.subr.mxu0 0.0
  %80 = vmatpush2.xpose.msra.mxu0 0.0
  %81 = vmatprep.subr.mxu0 0.0
  %82 = vmatpush2.xpose.msra.mxu0 0.0
  %83 = vmatprep.subr.mxu0 0.0
  %84 = vmatpush2.xpose.msra.mxu0 0.0
  %85 = vmatprep.subr.mxu0 0.0
  %86 = vmatpush2.xpose.msra.mxu0 0.0
  %87 = vmatprep.subr.mxu0 0.0
  %88 = vmatpush2.xpose.msra.mxu0 0.0
  %89 = vmatprep.subr.mxu0 0.0
  %90 = vmatpush2.xpose.msra.mxu0 0.0
  %91 = vmatprep.subr.mxu0 0.0
  %92 = vmatpush2.xpose.msra.mxu0 0.0
  %93 = vmatprep.subr.mxu0 0.0
  %94 = vmatpush2.xpose.msra.mxu0 0.0
  %95 = vmatprep.subr.mxu0 0.0
  %96 = vmatpush2.xpose.msra.mxu0 0.0
  %97 = vmatprep.subr.mxu0 0.0
  %98 = vmatpush2.xpose.msra.mxu0 0.0
  %99 = vmatprep.mubr.f32.mxu0 0.0
  %v100 = vand.u32 %v32, 4294901760
  %v101 = vsub.f32 %v32, %v100
  %v102 = vand.u32 %v101, 4294901760
  %v103 = vsub.f32 %v101, %v102
  %v104 = vand.u32 %v103, 4294901760
  %105 = vmatmul.mubr.f32.gmra.mxu0 %v104
  %v106 = vpop.f32.mrf.mxu0
  %v107 = vadd.f32 0.0, %v106
  %v108 = vpop.f32.mrf.mxu0
  %109 = vdwg.mxu0
  %110 = vmatprep.subr.mxu0 0.0
  %111 = vmatpush1.xpose.msra.mxu0 0.0
  %112 = vmatprep.subr.mxu0 0.0
  %113 = vmatpush1.xpose.msra.mxu0 0.0
  %114 = vmatprep.subr.mxu0 0.0
  %115 = vmatpush1.xpose.msra.mxu0 0.0
  %116 = vmatprep.subr.mxu0 0.0
  %117 = vmatpush1.xpose.msra.mxu0 0.0
  %118 = vmatprep.subr.mxu0 0.0
  %119 = vmatpush1.xpose.msra.mxu0 0.0
  %120 = vmatprep.subr.mxu0 0.0
  %121 = vmatpush1.xpose.msra.mxu0 0.0
  %122 = vmatprep.subr.mxu0 0.0
  %123 = vmatpush1.xpose.msra.mxu0 0.0
  %124 = vmatprep.subr.mxu0 0.0
  %125 = vmatpush1.xpose.msra.mxu0 0.0
  %126 = vmatprep.subr.mxu0 0.0
  %127 = vmatpush1.xpose.msra.mxu0 0.0
  %128 = vmatprep.subr.mxu0 0.0
  %129 = vmatpush1.xpose.msra.mxu0 0.0
  %130 = vmatprep.subr.mxu0 0.0
  %131 = vmatpush1.xpose.msra.mxu0 0.0
  %132 = vmatprep.subr.mxu0 0.0
  %133 = vmatpush1.xpose.msra.mxu0 0.0
  %134 = vmatprep.subr.mxu0 0.0
  %135 = vmatpush1.xpose.msra.mxu0 0.0
  %136 = vmatprep.subr.mxu0 0.0
  %137 = vmatpush1.xpose.msra.mxu0 0.0
  %138 = vmatprep.subr.mxu0 0.0
  %139 = vmatpush1.xpose.msra.mxu0 0.0
  %140 = vmatprep.subr.mxu0 0.0
  %v141 = vand.u32 %v33, 4294901760
  %v142 = vsub.f32 %v33, %v141
  %v143 = vand.u32 %v142, 4294901760
  %v144 = vsub.f32 %v142, %v143
  %v145 = vand.u32 %v144, 4294901760
  %146 = vmatpush1.xpose.msra.mxu0 %v145
  %147 = vmatprep.subr.mxu0 0.0
  %148 = vmatpush2.xpose.msra.mxu0 0.0
  %149 = vmatprep.subr.mxu0 0.0
  %150 = vmatpush2.xpose.msra.mxu0 0.0
  %151 = vmatprep.subr.mxu0 0.0
  %152 = vmatpush2.xpose.msra.mxu0 0.0
  %153 = vmatprep.subr.mxu0 0.0
  %154 = vmatpush2.xpose.msra.mxu0 0.0
  %155 = vmatprep.subr.mxu0 0.0
  %156 = vmatpush2.xpose.msra.mxu0 0.0
  %157 = vmatprep.subr.mxu0 0.0
  %158 = vmatpush2.xpose.msra.mxu0 0.0
  %159 = vmatprep.subr.mxu0 0.0
  %160 = vmatpush2.xpose.msra.mxu0 0.0
  %161 = vmatprep.subr.mxu0 0.0
  %162 = vmatpush2.xpose.msra.mxu0 0.0
  %163 = vmatprep.subr.mxu0 0.0
  %164 = vmatpush2.xpose.msra.mxu0 0.0
  %165 = vmatprep.subr.mxu0 0.0
  %166 = vmatpush2.xpose.msra.mxu0 0.0
  %167 = vmatprep.subr.mxu0 0.0
  %168 = vmatpush2.xpose.msra.mxu0 0.0
  %169 = vmatprep.subr.mxu0 0.0
  %170 = vmatpush2.xpose.msra.mxu0 0.0
  %171 = vmatprep.subr.mxu0 0.0
  %172 = vmatpush2.xpose.msra.mxu0 0.0
  %173 = vmatprep.subr.mxu0 0.0
  %174 = vmatpush2.xpose.msra.mxu0 0.0
  %175 = vmatprep.subr.mxu0 0.0
  %176 = vmatpush2.xpose.msra.mxu0 0.0
  %177 = vmatprep.subr.mxu0 0.0
  %178 = vmatpush2.xpose.msra.mxu0 0.0
  %179 = vmatprep.mubr.f32.mxu0 0.0
  %v180 = vand.u32 %v32, 4294901760
  %181 = vmatmul.mubr.f32.gmra.mxu0 %v180
  %v182 = vpop.f32.mrf.mxu0
  %v183 = vadd.f32 %v107, %v182
  %v184 = vpop.f32.mrf.mxu0
  %185 = vdwg.mxu0
  %186 = vmatprep.subr.mxu0 0.0
  %187 = vmatpush1.xpose.msra.mxu0 0.0
  %188 = vmatprep.subr.mxu0 0.0
  %189 = vmatpush1.xpose.msra.mxu0 0.0
  %190 = vmatprep.subr.mxu0 0.0
  %191 = vmatpush1.xpose.msra.mxu0 0.0
  %192 = vmatprep.subr.mxu0 0.0
  %193 = vmatpush1.xpose.msra.mxu0 0.0
  %194 = vmatprep.subr.mxu0 0.0
  %195 = vmatpush1.xpose.msra.mxu0 0.0
  %196 = vmatprep.subr.mxu0 0.0
  %197 = vmatpush1.xpose.msra.mxu0 0.0
  %198 = vmatprep.subr.mxu0 0.0
  %199 = vmatpush1.xpose.msra.mxu0 0.0
  %200 = vmatprep.subr.mxu0 0.0
  %201 = vmatpush1.xpose.msra.mxu0 0.0
  %202 = vmatprep.subr.mxu0 0.0
  %203 = vmatpush1.xpose.msra.mxu0 0.0
  %204 = vmatprep.subr.mxu0 0.0
  %205 = vmatpush1.xpose.msra.mxu0 0.0
  %206 = vmatprep.subr.mxu0 0.0
  %207 = vmatpush1.xpose.msra.mxu0 0.0
  %208 = vmatprep.subr.mxu0 0.0
  %209 = vmatpush1.xpose.msra.mxu0 0.0
  %210 = vmatprep.subr.mxu0 0.0
  %211 = vmatpush1.xpose.msra.mxu0 0.0
  %212 = vmatprep.subr.mxu0 0.0
  %213 = vmatpush1.xpose.msra.mxu0 0.0
  %214 = vmatprep.subr.mxu0 0.0
  %215 = vmatpush1.xpose.msra.mxu0 0.0
  %216 = vmatprep.subr.mxu0 0.0
  %v217 = vand.u32 %v33, 4294901760
  %v218 = vsub.f32 %v33, %v217
  %219 = vmatpush1.xpose.msra.mxu0 %v218
  %220 = vmatprep.subr.mxu0 0.0
  %221 = vmatpush2.xpose.msra.mxu0 0.0
  %222 = vmatprep.subr.mxu0 0.0
  %223 = vmatpush2.xpose.msra.mxu0 0.0
  %224 = vmatprep.subr.mxu0 0.0
  %225 = vmatpush2.xpose.msra.mxu0 0.0
  %226 = vmatprep.subr.mxu0 0.0
  %227 = vmatpush2.xpose.msra.mxu0 0.0
  %228 = vmatprep.subr.mxu0 0.0
  %229 = vmatpush2.xpose.msra.mxu0 0.0
  %230 = vmatprep.subr.mxu0 0.0
  %231 = vmatpush2.xpose.msra.mxu0 0.0
  %232 = vmatprep.subr.mxu0 0.0
  %233 = vmatpush2.xpose.msra.mxu0 0.0
  %234 = vmatprep.subr.mxu0 0.0
  %235 = vmatpush2.xpose.msra.mxu0 0.0
  %236 = vmatprep.subr.mxu0 0.0
  %237 = vmatpush2.xpose.msra.mxu0 0.0
  %238 = vmatprep.subr.mxu0 0.0
  %239 = vmatpush2.xpose.msra.mxu0 0.0
  %240 = vmatprep.subr.mxu0 0.0
  %241 = vmatpush2.xpose.msra.mxu0 0.0
  %242 = vmatprep.subr.mxu0 0.0
  %243 = vmatpush2.xpose.msra.mxu0 0.0
  %244 = vmatprep.subr.mxu0 0.0
  %245 = vmatpush2.xpose.msra.mxu0 0.0
  %246 = vmatprep.subr.mxu0 0.0
  %247 = vmatpush2.xpose.msra.mxu0 0.0
  %248 = vmatprep.subr.mxu0 0.0
  %249 = vmatpush2.xpose.msra.mxu0 0.0
  %250 = vmatprep.subr.mxu0 0.0
  %251 = vmatpush2.xpose.msra.mxu0 0.0
  %252 = vmatprep.mubr.f32.mxu0 0.0
  %v253 = vand.u32 %v32, 4294901760
  %v254 = vsub.f32 %v32, %v253
  %255 = vmatmul.mubr.f32.gmra.mxu0 %v254
  %v256 = vpop.f32.mrf.mxu0
  %v257 = vadd.f32 %v183, %v256
  %v258 = vpop.f32.mrf.mxu0
  %259 = vdwg.mxu0
  %260 = vmatprep.subr.mxu0 0.0
  %261 = vmatpush1.xpose.msra.mxu0 0.0
  %262 = vmatprep.subr.mxu0 0.0
  %263 = vmatpush1.xpose.msra.mxu0 0.0
  %264 = vmatprep.subr.mxu0 0.0
  %265 = vmatpush1.xpose.msra.mxu0 0.0
  %266 = vmatprep.subr.mxu0 0.0
  %267 = vmatpush1.xpose.msra.mxu0 0.0
  %268 = vmatprep.subr.mxu0 0.0
  %269 = vmatpush1.xpose.msra.mxu0 0.0
  %270 = vmatprep.subr.mxu0 0.0
  %271 = vmatpush1.xpose.msra.mxu0 0.0
  %272 = vmatprep.subr.mxu0 0.0
  %273 = vmatpush1.xpose.msra.mxu0 0.0
  %274 = vmatprep.subr.mxu0 0.0
  %275 = vmatpush1.xpose.msra.mxu0 0.0
  %276 = vmatprep.subr.mxu0 0.0
  %277 = vmatpush1.xpose.msra.mxu0 0.0
  %278 = vmatprep.subr.mxu0 0.0
  %279 = vmatpush1.xpose.msra.mxu0 0.0
  %280 = vmatprep.subr.mxu0 0.0
  %281 = vmatpush1.xpose.msra.mxu0 0.0
  %282 = vmatprep.subr.mxu0 0.0
  %283 = vmatpush1.xpose.msra.mxu0 0.0
  %284 = vmatprep.subr.mxu0 0.0
  %285 = vmatpush1.xpose.msra.mxu0 0.0
  %286 = vmatprep.subr.mxu0 0.0
  %287 = vmatpush1.xpose.msra.mxu0 0.0
  %288 = vmatprep.subr.mxu0 0.0
  %289 = vmatpush1.xpose.msra.mxu0 0.0
  %290 = vmatprep.subr.mxu0 0.0
  %v291 = vand.u32 %v33, 4294901760
  %292 = vmatpush1.xpose.msra.mxu0 %v291
  %293 = vmatprep.subr.mxu0 0.0
  %294 = vmatpush2.xpose.msra.mxu0 0.0
  %295 = vmatprep.subr.mxu0 0.0
  %296 = vmatpush2.xpose.msra.mxu0 0.0
  %297 = vmatprep.subr.mxu0 0.0
  %298 = vmatpush2.xpose.msra.mxu0 0.0
  %299 = vmatprep.subr.mxu0 0.0
  %300 = vmatpush2.xpose.msra.mxu0 0.0
  %301 = vmatprep.subr.mxu0 0.0
  %302 = vmatpush2.xpose.msra.mxu0 0.0
  %303 = vmatprep.subr.mxu0 0.0
  %304 = vmatpush2.xpose.msra.mxu0 0.0
  %305 = vmatprep.subr.mxu0 0.0
  %306 = vmatpush2.xpose.msra.mxu0 0.0
  %307 = vmatprep.subr.mxu0 0.0
  %308 = vmatpush2.xpose.msra.mxu0 0.0
  %309 = vmatprep.subr.mxu0 0.0
  %310 = vmatpush2.xpose.msra.mxu0 0.0
  %311 = vmatprep.subr.mxu0 0.0
  %312 = vmatpush2.xpose.msra.mxu0 0.0
  %313 = vmatprep.subr.mxu0 0.0
  %314 = vmatpush2.xpose.msra.mxu0 0.0
  %315 = vmatprep.subr.mxu0 0.0
  %316 = vmatpush2.xpose.msra.mxu0 0.0
  %317 = vmatprep.subr.mxu0 0.0
  %318 = vmatpush2.xpose.msra.mxu0 0.0
  %319 = vmatprep.subr.mxu0 0.0
  %320 = vmatpush2.xpose.msra.mxu0 0.0
  %321 = vmatprep.subr.mxu0 0.0
  %322 = vmatpush2.xpose.msra.mxu0 0.0
  %323 = vmatprep.subr.mxu0 0.0
  %324 = vmatpush2.xpose.msra.mxu0 0.0
  %325 = vmatprep.mubr.f32.mxu0 0.0
  %v326 = vand.u32 %v32, 4294901760
  %v327 = vsub.f32 %v32, %v326
  %v328 = vand.u32 %v327, 4294901760
  %329 = vmatmul.mubr.f32.gmra.mxu0 %v328
  %v330 = vpop.f32.mrf.mxu0
  %v331 = vadd.f32 %v257, %v330
  %v332 = vpop.f32.mrf.mxu0
  %333 = vdwg.mxu0
  %334 = vmatprep.subr.mxu0 0.0
  %335 = vmatpush1.xpose.msra.mxu0 0.0
  %336 = vmatprep.subr.mxu0 0.0
  %337 = vmatpush1.xpose.msra.mxu0 0.0
  %338 = vmatprep.subr.mxu0 0.0
  %339 = vmatpush1.xpose.msra.mxu0 0.0
  %340 = vmatprep.subr.mxu0 0.0
  %341 = vmatpush1.xpose.msra.mxu0 0.0
  %342 = vmatprep.subr.mxu0 0.0
  %343 = vmatpush1.xpose.msra.mxu0 0.0
  %344 = vmatprep.subr.mxu0 0.0
  %345 = vmatpush1.xpose.msra.mxu0 0.0
  %346 = vmatprep.subr.mxu0 0.0
  %347 = vmatpush1.xpose.msra.mxu0 0.0
  %348 = vmatprep.subr.mxu0 0.0
  %349 = vmatpush1.xpose.msra.mxu0 0.0
  %350 = vmatprep.subr.mxu0 0.0
  %351 = vmatpush1.xpose.msra.mxu0 0.0
  %352 = vmatprep.subr.mxu0 0.0
  %353 = vmatpush1.xpose.msra.mxu0 0.0
  %354 = vmatprep.subr.mxu0 0.0
  %355 = vmatpush1.xpose.msra.mxu0 0.0
  %356 = vmatprep.subr.mxu0 0.0
  %357 = vmatpush1.xpose.msra.mxu0 0.0
  %358 = vmatprep.subr.mxu0 0.0
  %359 = vmatpush1.xpose.msra.mxu0 0.0
  %360 = vmatprep.subr.mxu0 0.0
  %361 = vmatpush1.xpose.msra.mxu0 0.0
  %362 = vmatprep.subr.mxu0 0.0
  %363 = vmatpush1.xpose.msra.mxu0 0.0
  %364 = vmatprep.subr.mxu0 0.0
  %v365 = vand.u32 %v33, 4294901760
  %v366 = vsub.f32 %v33, %v365
  %v367 = vand.u32 %v366, 4294901760
  %368 = vmatpush1.xpose.msra.mxu0 %v367
  %369 = vmatprep.subr.mxu0 0.0
  %370 = vmatpush2.xpose.msra.mxu0 0.0
  %371 = vmatprep.subr.mxu0 0.0
  %372 = vmatpush2.xpose.msra.mxu0 0.0
  %373 = vmatprep.subr.mxu0 0.0
  %374 = vmatpush2.xpose.msra.mxu0 0.0
  %375 = vmatprep.subr.mxu0 0.0
  %376 = vmatpush2.xpose.msra.mxu0 0.0
  %377 = vmatprep.subr.mxu0 0.0
  %378 = vmatpush2.xpose.msra.mxu0 0.0
  %379 = vmatprep.subr.mxu0 0.0
  %380 = vmatpush2.xpose.msra.mxu0 0.0
  %381 = vmatprep.subr.mxu0 0.0
  %382 = vmatpush2.xpose.msra.mxu0 0.0
  %383 = vmatprep.subr.mxu0 0.0
  %384 = vmatpush2.xpose.msra.mxu0 0.0
  %385 = vmatprep.subr.mxu0 0.0
  %386 = vmatpush2.xpose.msra.mxu0 0.0
  %387 = vmatprep.subr.mxu0 0.0
  %388 = vmatpush2.xpose.msra.mxu0 0.0
  %389 = vmatprep.subr.mxu0 0.0
  %390 = vmatpush2.xpose.msra.mxu0 0.0
  %391 = vmatprep.subr.mxu0 0.0
  %392 = vmatpush2.xpose.msra.mxu0 0.0
  %393 = vmatprep.subr.mxu0 0.0
  %394 = vmatpush2.xpose.msra.mxu0 0.0
  %395 = vmatprep.subr.mxu0 0.0
  %396 = vmatpush2.xpose.msra.mxu0 0.0
  %397 = vmatprep.subr.mxu0 0.0
  %398 = vmatpush2.xpose.msra.mxu0 0.0
  %399 = vmatprep.subr.mxu0 0.0
  %400 = vmatpush2.xpose.msra.mxu0 0.0
  %401 = vmatprep.mubr.f32.mxu0 0.0
  %v402 = vand.u32 %v32, 4294901760
  %403 = vmatmul.mubr.f32.gmra.mxu0 %v402
  %v404 = vpop.f32.mrf.mxu0
  %v405 = vadd.f32 %v331, %v404
  %v406 = vpop.f32.mrf.mxu0
  %407 = vdwg.mxu0
  %408 = vmatprep.subr.mxu0 0.0
  %409 = vmatpush1.xpose.msra.mxu0 0.0
  %410 = vmatprep.subr.mxu0 0.0
  %411 = vmatpush1.xpose.msra.mxu0 0.0
  %412 = vmatprep.subr.mxu0 0.0
  %413 = vmatpush1.xpose.msra.mxu0 0.0
  %414 = vmatprep.subr.mxu0 0.0
  %415 = vmatpush1.xpose.msra.mxu0 0.0
  %416 = vmatprep.subr.mxu0 0.0
  %417 = vmatpush1.xpose.msra.mxu0 0.0
  %418 = vmatprep.subr.mxu0 0.0
  %419 = vmatpush1.xpose.msra.mxu0 0.0
  %420 = vmatprep.subr.mxu0 0.0
  %421 = vmatpush1.xpose.msra.mxu0 0.0
  %422 = vmatprep.subr.mxu0 0.0
  %423 = vmatpush1.xpose.msra.mxu0 0.0
  %424 = vmatprep.subr.mxu0 0.0
  %425 = vmatpush1.xpose.msra.mxu0 0.0
  %426 = vmatprep.subr.mxu0 0.0
  %427 = vmatpush1.xpose.msra.mxu0 0.0
  %428 = vmatprep.subr.mxu0 0.0
  %429 = vmatpush1.xpose.msra.mxu0 0.0
  %430 = vmatprep.subr.mxu0 0.0
  %431 = vmatpush1.xpose.msra.mxu0 0.0
  %432 = vmatprep.subr.mxu0 0.0
  %433 = vmatpush1.xpose.msra.mxu0 0.0
  %434 = vmatprep.subr.mxu0 0.0
  %435 = vmatpush1.xpose.msra.mxu0 0.0
  %436 = vmatprep.subr.mxu0 0.0
  %437 = vmatpush1.xpose.msra.mxu0 0.0
  %438 = vmatprep.subr.mxu0 0.0
  %v439 = vand.u32 %v33, 4294901760
  %440 = vmatpush1.xpose.msra.mxu0 %v439
  %441 = vmatprep.subr.mxu0 0.0
  %442 = vmatpush2.xpose.msra.mxu0 0.0
  %443 = vmatprep.subr.mxu0 0.0
  %444 = vmatpush2.xpose.msra.mxu0 0.0
  %445 = vmatprep.subr.mxu0 0.0
  %446 = vmatpush2.xpose.msra.mxu0 0.0
  %447 = vmatprep.subr.mxu0 0.0
  %448 = vmatpush2.xpose.msra.mxu0 0.0
  %449 = vmatprep.subr.mxu0 0.0
  %450 = vmatpush2.xpose.msra.mxu0 0.0
  %451 = vmatprep.subr.mxu0 0.0
  %452 = vmatpush2.xpose.msra.mxu0 0.0
  %453 = vmatprep.subr.mxu0 0.0
  %454 = vmatpush2.xpose.msra.mxu0 0.0
  %455 = vmatprep.subr.mxu0 0.0
  %456 = vmatpush2.xpose.msra.mxu0 0.0
  %457 = vmatprep.subr.mxu0 0.0
  %458 = vmatpush2.xpose.msra.mxu0 0.0
  %459 = vmatprep.subr.mxu0 0.0
  %460 = vmatpush2.xpose.msra.mxu0 0.0
  %461 = vmatprep.subr.mxu0 0.0
  %462 = vmatpush2.xpose.msra.mxu0 0.0
  %463 = vmatprep.subr.mxu0 0.0
  %464 = vmatpush2.xpose.msra.mxu0 0.0
  %465 = vmatprep.subr.mxu0 0.0
  %466 = vmatpush2.xpose.msra.mxu0 0.0
  %467 = vmatprep.subr.mxu0 0.0
  %468 = vmatpush2.xpose.msra.mxu0 0.0
  %469 = vmatprep.subr.mxu0 0.0
  %470 = vmatpush2.xpose.msra.mxu0 0.0
  %471 = vmatprep.subr.mxu0 0.0
  %472 = vmatpush2.xpose.msra.mxu0 0.0
  %473 = vmatprep.mubr.f32.mxu0 0.0
  %v474 = vand.u32 %v32, 4294901760
  %475 = vmatmul.mubr.f32.gmra.mxu0 %v474
  %v476 = vpop.f32.mrf.mxu0
  %v477 = vadd.f32 %v405, %v476
  %v478 = vpop.f32.mrf.mxu0
  %479 = vdwg.mxu0
  %v480 = vld [vmem:[%s2] sm:$0xff]
  %v481 = vld [vmem:[%s3] sm:$0x1]
  %483 = vset.pattern.permute.xlu0 0
  %484 = vperm.xlu0 %483, %v480
  %v485 = vpop.permute.xlu0 %484
  %v488 = vlaneseq
  %v489 = vshrl.u32 %v488, 7
  %v490 = vsub.s32 0, %v489
  %v491 = vrot.slane %v481, %v490
  %v493 = vadd.f32 %v485, %v491
  %v494 = vsub.f32 %v493, %v477
  %v495 = vld [vmem:[%s4] sm:$0xff]
  %v496 = vld [vmem:[%s5] sm:$0x1]
  %497 = vset.pattern.permute.xlu0 0
  %498 = vperm.xlu0 %497, %v495
  %v499 = vpop.permute.xlu0 %498
  %v500 = vlaneseq
  %v501 = vshrl.u32 %v500, 7
  %v502 = vsub.s32 0, %v501
  %v503 = vrot.slane %v496, %v502
  %vm504 = vcmp.eq.s32.totalorder %v499, %v503
  %v505 = vsel %vm504, %v494, -inf
  %vm506 = vcmask 64512
  %v507 = vsel %vm506, %v505, -inf
  %508 = vmax.xlane.f32.xlu0 %v507
  %v509 = vpop.xlane.xlu0 %508
  %v510 = vsel %vm504, inf, %v494
  %v511 = vsel %vm506, %v510, inf
  %512 = vmin.xlane.f32.xlu0 %v511
  %v513 = vpop.xlane.xlu0 %512
  %v514 = vld [vmem:[%s6] sm:$0xff]
  %v515 = vmax.f32 %v514, %v509
  %vm516 = vcmask 7168
  %517 = vst.msk [vmem:[%s6] sm:$0xff] %vm516, %v515
  %v518 = vld [vmem:[%s7] sm:$0xff]
  %v519 = vmin.f32 %v518, %v513
  %520 = vst.msk [vmem:[%s7] sm:$0xff] %vm516, %v519
  // Predicated region
  $region30: #{tpu_custom_call.1} parent=0 // pred_check
    %p521 = pneg %p25
  $region31: #{tpu_custom_call.1} parent=0 // pred_check_branch
    %523 = sbr.rel (%p521) target = $region33
  $region32: #{tpu_custom_call.1} parent=0 // pred_region
    %v524 = vld [vmem:[%s6] sm:$0xff]
    %v525 = vmul.f32 %v524, 2.0
    %v526 = vmax.f32 %v525, 1e-12
    %v527 = vrsqrt.pop %v526
    %v528 = vmul.f32 %v526, %v527
    %vm529 = vcmp.eq.f32.partialorder %v526, inf
    %v530 = vsel %vm529, %v526, %v528
    %vm531 = vcmp.eq.f32.partialorder %v526, 0.0
    %v532 = vand.u32 %v526, 2147483648
    %v533 = vsel %vm531, %v532, %v530
    %534 = vst.msk [vmem:[%s6] sm:$0xff] %vm516, %v533
    %v535 = vld [vmem:[%s7] sm:$0xff]
    %v536 = vmul.f32 %v535, 2.0
    %v537 = vmax.f32 %v536, 1e-12
    %v538 = vrsqrt.pop %v537
    %v539 = vmul.f32 %v537, %v538
    %vm540 = vcmp.eq.f32.partialorder %v537, inf
    %v541 = vsel %vm540, %v537, %v539
    %vm542 = vcmp.eq.f32.partialorder %v537, 0.0
    %v543 = vand.u32 %v537, 2147483648
    %v544 = vsel %vm542, %v543, %v541
    %545 = vst.msk [vmem:[%s7] sm:$0xff] %vm516, %v544
  $region33: #{tpu_custom_call.1} parent=0 // pred_fallthru
    _
  // Predicated region
  $region34: #{tpu_custom_call.1} parent=0 // pred_check
    _
  $region35: #{tpu_custom_call.1} parent=0 // pred_check_branch
    %547 = sbr.rel (0) target = $region37
  $region36: #{tpu_custom_call.1} parent=0 // pred_region
    _
  $region37: #{tpu_custom_call.1} parent=0 // pred_fallthru
    _
  // Predicated region
  $region38: #{tpu_custom_call.1} parent=0 // pred_check
    _
  $region39: #{tpu_custom_call.1} parent=0 // pred_check_branch
    %549 = sbr.rel (0) target = $region41
  $region40: #{tpu_custom_call.1} parent=0 // pred_region
    _
  $region41: #{tpu_custom_call.1} parent=0 // pred_fallthru
    _
  // Predicated region
  $region42: #{tpu_custom_call.1} parent=0 // pred_check
    _
  $region43: #{tpu_custom_call.1} parent=0 // pred_check_branch
    %551 = sbr.rel (0) target = $region45
  $region44: #{tpu_custom_call.1} parent=0 // pred_region
    _
  $region45: #{tpu_custom_call.1} parent=0 // pred_fallthru
    _
  // Predicated region
  $region46: #{tpu_custom_call.1} parent=0 // pred_check
    _
  $region47: #{tpu_custom_call.1} parent=0 // pred_check_branch
    %553 = sbr.rel (0) target = $region49
  $region48: #{tpu_custom_call.1} parent=0 // pred_region
    _
  $region49: #{tpu_custom_call.1} parent=0 // pred_fallthru
    _

</llo_original>
